<compile_context>
chip_gen: v5e
topology: v5e:2x2
jax: 0.10.0
libtpu: 0.0.40
codegen_flags: <defaults>
</compile_context>

<pallas_src>
import numpy as np
import jax
import jax.numpy as jnp
from jax.experimental import pallas as pl
from jax.experimental.pallas import tpu as pltpu


def build_flower_params(n, d, radial_noise=0.1, tangent_noise=0.001):
    """Deterministic reproduction of Flower.__init__ prior_mean / prior_cov."""
    prior_mean = np.empty((n, d), dtype=np.float64)
    prior_cov = np.empty((n, d, d), dtype=np.float64)
    for l in range(n):
        ang = l * 2.0 * np.pi / n
        prior_mean[l] = [np.cos(ang), np.sin(ang)] + [0.0] * (d - 2)
        v1 = [np.cos(ang), np.sin(ang)]
        v2 = [-np.sin(ang), np.cos(ang)]
        M = np.eye(d)
        S = np.eye(d)
        np.fill_diagonal(S, [radial_noise] + [tangent_noise] * (d - 1))
        M[0:2, 0:2] = np.vstack((v1, v2)).T
        prior_cov[l] = M @ S @ np.linalg.inv(M)
    means = jnp.asarray(prior_mean, dtype=jnp.float32)
    # MultivariateNormal.sample() == mean + L @ eps, L = cholesky(cov)
    chol = jnp.linalg.cholesky(jnp.asarray(prior_cov, dtype=jnp.float32))  # (n, d, d)
    return means, chol


def flower_kernel(yT_ref, epsT_ref, meansT_ref, lflat_ref, zT_ref):
    # yT_ref:    (n, bB)     one-hot labels, batch on the lane axis
    # epsT_ref:  (d, bB)     standard normal noise, batch on the lane axis
    # meansT_ref:(d, n)      Gaussian means, transposed
    # lflat_ref: (d, d*n)    lflat[i, j*n + k] = L[k, i, j]  (pre-flattened Cholesky)
    # zT_ref:    (d, bB)     output samples (transposed), lane-dense store
    yT = yT_ref[...]
    epsT = epsT_ref[...]
    meansT = meansT_ref[...]
    lflat = lflat_ref[...]

    n, bB = yT.shape
    d = epsT.shape[0]

    # One-hot gather of the per-sample mean: (d, n) @ (n, bB) -> (d, bB)   [MXU]
    mean_sel = jnp.dot(meansT, yT, preferred_element_type=jnp.float32)

    # Per-row outer product w[j*n + k, b] = eps[j, b] * y[k, b]   [single VPU bcast-mul]
    # (n == 8 sits on the sublane axis, so the collapse to (d*n, bB) is tile-aligned.)
    w = (epsT[:, None, :] * yT[None, :, :]).reshape(d * n, bB)

    # Class-selected noise transform: (d, d*n) @ (d*n, bB) -> (d, bB)      [MXU]
    # noise[i, b] = sum_{j,k} L[k, i, j] * eps[j, b] * y[k, b] = (L[argmax y_b] @ eps_b)[i]
    noise = jnp.dot(lflat, w, preferred_element_type=jnp.float32)

    zT_ref[...] = (mean_sel + noise).astype(zT_ref.dtype)


def _round_up(x, m):
    return ((x + m - 1) // m) * m


def flower_forward(y, eps, means, chol, block_b=1024):
    """y: (B, n) one-hot float32, eps: (B, d) float32 -> z: (B, d) float32."""
    B, n = y.shape
    d = eps.shape[-1]

    # Lane-aligned batch tile; pad the batch with zero rows (zero one-hot row
    # produces a zero sample, which we slice away) -> no ragged-tile masking needed.
    bB = _round_up(min(block_b, _round_up(B, 128)), 128)
    B_pad = _round_up(B, bB)
    grid = (B_pad // bB,)

    pad = B_pad - B
    yT = jnp.pad(y.astype(jnp.float32), ((0, pad), (0, 0))).T      # (n, B_pad)
    epsT = jnp.pad(eps.astype(jnp.float32), ((0, pad), (0, 0))).T  # (d, B_pad)

    meansT = means.T                                               # (d, n)
    # lflat[i, j*n + k] = chol[k, i, j]
    lflat = jnp.transpose(chol, (1, 2, 0)).reshape(d, d * n)       # (d, d*n)

    flops = 2 * B_pad * (n * d + n * d * d) + B_pad * n * d
    bytes_accessed = 4 * (n * B_pad + 2 * d * B_pad + n * d + n * d * d)

    zT = pl.pallas_call(
        flower_kernel,
        out_shape=jax.ShapeDtypeStruct((d, B_pad), jnp.float32),
        grid=grid,
        in_specs=[
            pl.BlockSpec((n, bB), lambda i: (0, i)),        # yT tile
            pl.BlockSpec((d, bB), lambda i: (0, i)),        # epsT tile
            pl.BlockSpec((d, n), lambda i: (0, 0)),         # meansT (resident)
            pl.BlockSpec((d, d * n), lambda i: (0, 0)),     # Cholesky slab (resident)
        ],
        out_specs=pl.BlockSpec((d, bB), lambda i: (0, i)),  # lane-dense output block
        compiler_params=pltpu.CompilerParams(
            dimension_semantics=("parallel",)),
        cost_estimate=pl.CostEstimate(
            flops=flops, transcendentals=0, bytes_accessed=bytes_accessed),
    )(yT, epsT, meansT, lflat)

    return zT[:, :B].T  # back to (B, d); pure layout plumbing in the wrapper


if __name__ == "__main__":
    # Small shapes consistent with the module: flower prior with n Gaussians in d dims.
    batch = 16
    n_gaussians = 8
    dimensions = 4

    means, chol = build_flower_params(n_gaussians, dimensions)

    key = jax.random.PRNGKey(0)
    k_lbl, k_eps = jax.random.split(key)
    labels = jax.random.randint(k_lbl, (batch,), 0, n_gaussians)
    y = jax.nn.one_hot(labels, n_gaussians, dtype=jnp.float32)              # (B, n)
    eps = jax.random.normal(k_eps, (batch, dimensions), dtype=jnp.float32)  # (B, d)
    # TODO(synk): torch's MultivariateNormal uses torch RNG internally; we supply the
    # standard-normal draw explicitly (same distribution, different RNG stream).

    z = flower_forward(y, eps, means, chol)
    z = jax.block_until_ready(z)

    # Reference check in plain JAX: z_i = mean[argmax y_i] + L[argmax y_i] @ eps_i
    z_ref = means[labels] + jnp.einsum("bij,bj->bi", chol[labels], eps)
    assert z.shape == (batch, dimensions) and z.dtype == jnp.float32
    assert np.allclose(np.asarray(z), np.asarray(z_ref), rtol=1e-5, atol=1e-5), \
        "Pallas output mismatch vs reference"

    print("KERNEL_OK")
</pallas_src>

<mosaic_0001>
module attributes {stable_mosaic.version = 11 : i64} {
  func.func @flower_kernel(%arg0: i32, %arg1: memref<8x128xf32, #tpu.memory_space<vmem>>, %arg2: memref<4x128xf32, #tpu.memory_space<vmem>>, %arg3: memref<4x8xf32, #tpu.memory_space<vmem>>, %arg4: memref<4x32xf32, #tpu.memory_space<vmem>>, %arg5: memref<4x128xf32, #tpu.memory_space<vmem>>) attributes {dimension_semantics = [#tpu.dimension_semantics<parallel>], iteration_bounds = array<i64: 1>, scalar_prefetch = 0 : i64, scratch_operands = 0 : i64, tpu.core_type = #tpu.core_type<tc>, window_params = [{transform_indices = @transform_0, window_bounds = array<i64: 8, 128>}, {transform_indices = @transform_1, window_bounds = array<i64: 4, 128>}, {pipeline_mode = #tpu.pipeline_mode<synchronous>, transform_indices = @transform_2, window_bounds = array<i64: 4, 8>}, {pipeline_mode = #tpu.pipeline_mode<synchronous>, transform_indices = @transform_3, window_bounds = array<i64: 4, 32>}, {transform_indices = @transform_4, window_bounds = array<i64: 4, 128>}]} {
    %c0 = arith.constant 0 : index
    %c0_0 = arith.constant 0 : index
    %0 = vector.load %arg1[%c0, %c0_0] : memref<8x128xf32, #tpu.memory_space<vmem>>, vector<8x128xf32>
    %c0_1 = arith.constant 0 : index
    %c0_2 = arith.constant 0 : index
    %1 = vector.load %arg2[%c0_1, %c0_2] : memref<4x128xf32, #tpu.memory_space<vmem>>, vector<4x128xf32>
    %c0_3 = arith.constant 0 : index
    %c0_4 = arith.constant 0 : index
    %2 = vector.load %arg3[%c0_3, %c0_4] : memref<4x8xf32, #tpu.memory_space<vmem>>, vector<4x8xf32>
    %c0_5 = arith.constant 0 : index
    %c0_6 = arith.constant 0 : index
    %3 = vector.load %arg4[%c0_5, %c0_6] : memref<4x32xf32, #tpu.memory_space<vmem>>, vector<4x32xf32>
    %cst = arith.constant dense<0.000000e+00> : vector<4x128xf32>
    %4 = tpu.matmul %2, %0, %cst {dimension_numbers = #tpu.dot_dimension_numbers<[1], [0], [0], [1], [0, 0, 1, 1], [], []>} : vector<4x8xf32>, vector<8x128xf32>, vector<4x128xf32> -> vector<4x128xf32>
    %5 = vector.shape_cast %1 : vector<4x128xf32> to vector<4x1x128xf32>
    %6 = vector.shape_cast %0 : vector<8x128xf32> to vector<1x8x128xf32>
    %7 = vector.broadcast %5 : vector<4x1x128xf32> to vector<4x8x128xf32>
    %8 = vector.broadcast %6 : vector<1x8x128xf32> to vector<4x8x128xf32>
    %9 = arith.mulf %7, %8 : vector<4x8x128xf32>
    %10 = vector.shape_cast %9 : vector<4x8x128xf32> to vector<32x128xf32>
    %cst_7 = arith.constant dense<0.000000e+00> : vector<4x128xf32>
    %11 = tpu.matmul %3, %10, %cst_7 {dimension_numbers = #tpu.dot_dimension_numbers<[1], [0], [0], [1], [0, 0, 1, 1], [], []>} : vector<4x32xf32>, vector<32x128xf32>, vector<4x128xf32> -> vector<4x128xf32>
    %12 = arith.addf %4, %11 : vector<4x128xf32>
    %c0_8 = arith.constant 0 : index
    %c0_9 = arith.constant 0 : index
    %13 = vector.load %arg5[%c0_8, %c0_9] : memref<4x128xf32, #tpu.memory_space<vmem>>, vector<4x128xf32>
    tpu.vector_store %arg5[%c0_8, %c0_9], %12 {strides = array<i32>} : memref<4x128xf32, #tpu.memory_space<vmem>>, vector<4x128xf32>,
    return
  }
  func.func @transform_0(%arg0: i32) -> (i32, i32) {
    %c0_i32 = arith.constant 0 : i32
    %c0_i32_0 = arith.constant 0 : i32
    return %c0_i32, %arg0 : i32, i32
  }
  func.func @transform_1(%arg0: i32) -> (i32, i32) {
    %c0_i32 = arith.constant 0 : i32
    %c0_i32_0 = arith.constant 0 : i32
    return %c0_i32, %arg0 : i32, i32
  }
  func.func @transform_2(%arg0: i32) -> (i32, i32) {
    %c0_i32 = arith.constant 0 : i32
    %c0_i32_0 = arith.constant 0 : i32
    %c0_i32_1 = arith.constant 0 : i32
    return %c0_i32, %c0_i32_0 : i32, i32
  }
  func.func @transform_3(%arg0: i32) -> (i32, i32) {
    %c0_i32 = arith.constant 0 : i32
    %c0_i32_0 = arith.constant 0 : i32
    %c0_i32_1 = arith.constant 0 : i32
    return %c0_i32, %c0_i32_0 : i32, i32
  }
  func.func @transform_4(%arg0: i32) -> (i32, i32) {
    %c0_i32 = arith.constant 0 : i32
    %c0_i32_0 = arith.constant 0 : i32
    return %c0_i32, %arg0 : i32, i32
  }
}

</mosaic_0001>

<llo_original>
// kernel: tpu_custom_call.1
$region0: #{tpu_custom_call.1}
  #allocation0 [shape = 'u32[]', space=smem, size = 0x4, offset = 0x4, fixed_abs, tag = 'smem constant byte address 0x4 - core index']
  #allocation1 [shape = 'u32[72,128]{1,0:T(1,128)}', space=vmem, size = 0x9000, scoped, tag = 'internal scratch']
  %s0 = inlined_call_operand.hbm [shape: f32[8,128], index: 0, kind: input, shape index: {}]
  %s1 = inlined_call_operand.hbm [shape: f32[4,128], index: 1, kind: input, shape index: {}]
  %s2 = inlined_call_operand.hbm [shape: f32[4,8], index: 2, kind: input, shape index: {}]
  %s3 = inlined_call_operand.hbm [shape: f32[4,32], index: 3, kind: input, shape index: {}]
  %s4 = inlined_call_operand.hbm [shape: f32[4,128], index: 4, kind: output, shape index: {}]
  %s5 = sld [smem:[#allocation0]]
  $region42: #{tpu_custom_call.1} parent=0
    _
  %s7 = ssub.s32 1, %s5
  %s8 = scalar_select 0, %s7, %s5
  $region1: #{tpu_custom_call.1} parent=0
    #allocation2 [shape = 'u8[4096]{0}', space=vmem, size = 0x1000, scoped, tag = 'input window, operand 0, single buffered']
    #allocation3 [shape = 's32[1]{0}', space=sflag, size = 0x4, scoped, tag = 'scoped memory for tpu_custom_call.1']
    #allocation4 [shape = 's32[1]{0}', space=sflag, size = 0x4, scoped, tag = 'scoped memory for tpu_custom_call.1']
    #allocation5 [shape = 'u8[2048]{0}', space=vmem, size = 0x800, scoped, tag = 'input window, operand 1, single buffered']
    #allocation6 [shape = 's32[1]{0}', space=sflag, size = 0x4, scoped, tag = 'scoped memory for tpu_custom_call.1']
    #allocation7 [shape = 'u8[2048]{0}', space=vmem, size = 0x800, scoped, tag = 'input window, operand 2, single buffered']
    #allocation8 [shape = 'u8[2048]{0}', space=vmem, size = 0x800, scoped, tag = 'input window, operand 3, single buffered']
    #allocation9 [shape = 's32[1]{0}', space=sflag, size = 0x4, scoped, tag = 'scoped memory for tpu_custom_call.1']
    #allocation10 [shape = 'u8[2048]{0}', space=vmem, size = 0x800, scoped, tag = 'output window, operand 0, single buffered']
    %9 = vsyncpa [#allocation3], 0
    %10 = vsyncpa [#allocation6], 0
    %11 = vsyncpa [#allocation9], 0
    %12 = vsyncpa [#allocation4], 0
    // Predicated region
    $region2: #{tpu_custom_call.1} parent=1 // pred_check
      _
    $region3: #{tpu_custom_call.1} parent=1 // pred_check_branch
      %14 = sbr.rel (0) target = $region5
    $region4: #{tpu_custom_call.1} parent=1 // pred_region
      %16 = vsyncadd [#allocation3], 0
      %s18 = sshll.u32 %s0, 4
      %s19 = int_to_ptr.hbm [resolvable:$true] %s18
      %s20 = sshll.u32 [#allocation2], 4
      %s21 = int_to_ptr.vmem [resolvable:$true] %s20
      %23 = dma.hbm_to_vmem [thread:$0]  %s19, 128, %s21, [#allocation3]
    $region5: #{tpu_custom_call.1} parent=1 // pred_fallthru
      _
    // Predicated region
    $region6: #{tpu_custom_call.1} parent=1 // pred_check
      _
    $region7: #{tpu_custom_call.1} parent=1 // pred_check_branch
      %25 = sbr.rel (0) target = $region9
    $region8: #{tpu_custom_call.1} parent=1 // pred_region
      %27 = vsyncadd [#allocation6], 0
      %s29 = sshll.u32 %s1, 4
      %s30 = int_to_ptr.hbm [resolvable:$true] %s29
      %s31 = sshll.u32 [#allocation5], 4
      %s32 = int_to_ptr.vmem [resolvable:$true] %s31
      %34 = dma.hbm_to_vmem [thread:$0]  %s30, 64, %s32, [#allocation6]
    $region9: #{tpu_custom_call.1} parent=1 // pred_fallthru
      _
    // Predicated region
    $region10: #{tpu_custom_call.1} parent=1 // pred_check
      _
    $region11: #{tpu_custom_call.1} parent=1 // pred_check_branch
      %36 = sbr.rel (0) target = $region13
    $region12: #{tpu_custom_call.1} parent=1 // pred_region
      %38 = vsyncadd [#allocation6], 0
      %s40 = sshll.u32 %s2, 4
      %s41 = int_to_ptr.hbm [resolvable:$true] %s40
      %s42 = sshll.u32 [#allocation7], 4
      %s43 = int_to_ptr.vmem [resolvable:$true] %s42
      %45 = dma.hbm_to_vmem [thread:$0]  %s41, 64, %s43, [#allocation6]
    $region13: #{tpu_custom_call.1} parent=1 // pred_fallthru
      _
    // Predicated region
    $region14: #{tpu_custom_call.1} parent=1 // pred_check
      _
    $region15: #{tpu_custom_call.1} parent=1 // pred_check_branch
      %47 = sbr.rel (0) target = $region17
    $region16: #{tpu_custom_call.1} parent=1 // pred_region
      %49 = vsyncadd [#allocation9], 0
      %s51 = sshll.u32 %s3, 4
      %s52 = int_to_ptr.hbm [resolvable:$true] %s51
      %s53 = sshll.u32 [#allocation8], 4
      %s54 = int_to_ptr.vmem [resolvable:$true] %s53
      %56 = dma.hbm_to_vmem [thread:$0]  %s52, 64, %s54, [#allocation9]
    $region17: #{tpu_custom_call.1} parent=1 // pred_fallthru
      _
    // Predicated region
    $region18: #{tpu_custom_call.1} parent=1 // pred_check
      _
    $region19: #{tpu_custom_call.1} parent=1 // pred_check_branch
      %58 = sbr.rel (0) target = $region21
    $region20: #{tpu_custom_call.1} parent=1 // pred_region
      %60 = dma.done [#allocation3], 128
    $region21: #{tpu_custom_call.1} parent=1 // pred_fallthru
      _
    // Predicated region
    $region22: #{tpu_custom_call.1} parent=1 // pred_check
      _
    $region23: #{tpu_custom_call.1} parent=1 // pred_check_branch
      %62 = sbr.rel (0) target = $region25
    $region24: #{tpu_custom_call.1} parent=1 // pred_region
      %64 = dma.done [#allocation6], 64
    $region25: #{tpu_custom_call.1} parent=1 // pred_fallthru
      _
    // Predicated region
    $region26: #{tpu_custom_call.1} parent=1 // pred_check
      _
    $region27: #{tpu_custom_call.1} parent=1 // pred_check_branch
      %66 = sbr.rel (0) target = $region29
    $region28: #{tpu_custom_call.1} parent=1 // pred_region
      %68 = dma.done [#allocation6], 64
    $region29: #{tpu_custom_call.1} parent=1 // pred_fallthru
      _
    // Predicated region
    $region30: #{tpu_custom_call.1} parent=1 // pred_check
      _
    $region31: #{tpu_custom_call.1} parent=1 // pred_check_branch
      %70 = sbr.rel (0) target = $region33
    $region32: #{tpu_custom_call.1} parent=1 // pred_region
      %72 = dma.done [#allocation9], 64
    $region33: #{tpu_custom_call.1} parent=1 // pred_fallthru
      _
    %v73 = vld [vmem:[#allocation2] sm:$0xff]
    %v74 = vld [vmem:[#allocation5] sm:$0xf]
    %v75 = vld [vmem:[#allocation7] sm:$0xf]
    %v76 = vld [vmem:[#allocation8] sm:$0xf]
    %v78 = vrot.slane %v74, 1
    %v79 = vrot.slane %v74, 2
    %v80 = vrot.slane %v74, 3
    %v81 = vperm.slane %v74, 0
    %v82 = vperm.slane %v78, 0
    %v83 = vperm.slane %v79, 0
    %v84 = vperm.slane %v80, 0
    %v89 = vmul.f32 %v81, %v73
    %v90 = vmul.f32 %v82, %v73
    %v91 = vmul.f32 %v83, %v73
    %v92 = vmul.f32 %v84, %v73
    %vm93 = vcmask 261120
    %v95 = vsel %vm93, %v76, 0
    %97 = vmatpush.msra.mxu0 0.0
    %98 = vmatpush.msra.mxu0 0.0
    %99 = vmatpush.msra.mxu0 0.0
    %100 = vmatpush.msra.mxu0 0.0
    %101 = vmatpush.msra.mxu0 0.0
    %102 = vmatpush.msra.mxu0 0.0
    %103 = vmatpush.msra.mxu0 0.0
    %104 = vmatpush.msra.mxu0 0.0
    %105 = vmatpush.msra.mxu0 0.0
    %106 = vmatpush.msra.mxu0 0.0
    %107 = vmatpush.msra.mxu0 0.0
    %108 = vmatpush.msra.mxu0 0.0
    %109 = vmatpush.msra.mxu0 %v92
    %110 = vmatpush.msra.mxu0 %v91
    %111 = vmatpush.msra.mxu0 %v90
    %112 = vmatpush.msra.mxu0 %v89
    %113 = vmatmul.f32.gmra.mxu0 %v95
    %v114 = vpop.f32.mrf.mxu0
    %v115 = vadd.f32 0.0, %v114
    %116 = vdwg.mxu0
    %vm117 = vcmask 64512
    %v119 = vsel %vm117, %v75, 0
    %121 = vmatpush.msra.mxu0 0.0
    %122 = vmatpush.msra.mxu0 0.0
    %123 = vmatpush.msra.mxu0 0.0
    %124 = vmatpush.msra.mxu0 0.0
    %125 = vmatpush.msra.mxu0 0.0
    %126 = vmatpush.msra.mxu0 0.0
    %127 = vmatpush.msra.mxu0 0.0
    %128 = vmatpush.msra.mxu0 0.0
    %129 = vmatpush.msra.mxu0 0.0
    %130 = vmatpush.msra.mxu0 0.0
    %131 = vmatpush.msra.mxu0 0.0
    %132 = vmatpush.msra.mxu0 0.0
    %133 = vmatpush.msra.mxu0 0.0
    %134 = vmatpush.msra.mxu0 0.0
    %135 = vmatpush.msra.mxu0 0.0
    %136 = vmatpush.msra.mxu0 %v73
    %137 = vmatmul.f32.gmra.mxu0 %v119
    %v138 = vpop.f32.mrf.mxu0
    %v139 = vadd.f32 %v115, %v138
    %140 = vdwg.mxu0
    %141 = vst [vmem:[#allocation10] sm:$0xf] %v139
    // Predicated region
    $region34: #{tpu_custom_call.1} parent=1 // pred_check
      _
    $region35: #{tpu_custom_call.1} parent=1 // pred_check_branch
      %143 = sbr.rel (0) target = $region37
    $region36: #{tpu_custom_call.1} parent=1 // pred_region
      %145 = vsyncadd [#allocation4], 0
      %s147 = sshll.u32 [#allocation10], 4
      %s148 = int_to_ptr.vmem [resolvable:$true] %s147
      %s149 = sshll.u32 %s4, 4
      %s150 = int_to_ptr.hbm [resolvable:$true] %s149
      %152 = dma.vmem_to_hbm [thread:$0]  %s148, 64, %s150, [#allocation4]
    $region37: #{tpu_custom_call.1} parent=1 // pred_fallthru
      _
    // Predicated region
    $region38: #{tpu_custom_call.1} parent=1 // pred_check
      _
    $region39: #{tpu_custom_call.1} parent=1 // pred_check_branch
      %154 = sbr.rel (0) target = $region41
    $region40: #{tpu_custom_call.1} parent=1 // pred_region
      %156 = dma.done [#allocation4], 64
    $region41: #{tpu_custom_call.1} parent=1 // pred_fallthru
      _
    %157 = vsyncpa [#allocation3], 1
    %158 = vsyncpa [#allocation6], 1
    %159 = vsyncpa [#allocation9], 1
    %160 = vsyncpa [#allocation4], 1

</llo_original>
